<compile_context>
chip_gen: v7x
topology: tpu7x:2x2x1
jax: 0.10.0
libtpu: 0.0.40
codegen_flags: <defaults>
</compile_context>

<pallas_src>
import jax
import jax.numpy as jnp
from jax.experimental import pallas as pl
from jax.experimental.pallas import tpu as pltpu


def make_positional_encoding(d_model: int, max_len: int = 256) -> jnp.ndarray:
    """(max_len, d_model) sin/cos table; same math as the torch __init__."""
    position = jnp.arange(0, max_len, dtype=jnp.float32)[:, None]            # (max_len, 1)
    div_term = jnp.exp(
        jnp.arange(0, d_model, 2, dtype=jnp.float32)
        * (-jnp.log(jnp.float32(10000.0)) / d_model)
    )                                                                         # (ceil(D/2),)
    pe = jnp.zeros((max_len, d_model), dtype=jnp.float32)
    pe = pe.at[:, 0::2].set(jnp.sin(position * div_term))
    # NOTE: the torch reference errors for odd d_model; we truncate div_term instead
    # (intentional, documented divergence).
    pe = pe.at[:, 1::2].set(jnp.cos(position * div_term[: d_model // 2]))
    return pe


def _pe_add_kernel(x_ref, pe_ref, o_ref):
    # Elementwise add; the (1, tc) pe block broadcasts over the (tb, tc) x block.
    # Compute in the output dtype (torch promotes low-precision x + fp32 pe to fp32).
    o_ref[...] = x_ref[...].astype(o_ref.dtype) + pe_ref[...].astype(o_ref.dtype)


def _cdiv(a: int, b: int) -> int:
    return -(-a // b)


def _round_up(n: int, m: int) -> int:
    return _cdiv(n, m) * m


def _target_block_bytes() -> int:
    """Generation-dependent block target: ~4 MiB on v5e/v6e (128 MiB VMEM),
    ~2 MiB on v7x (64 MiB VMEM shared by two TensorCores)."""
    try:
        info = pltpu.get_tpu_info()
        vmem = getattr(info, "vmem_capacity_bytes", None)
        if vmem is not None and int(vmem) >= 96 * 1024 * 1024:
            return 4 * 1024 * 1024
    except Exception:
        pass
    return 2 * 1024 * 1024


def _pick_flat_tiles(batch: int, cols: int, stream_itemsize: int,
                     sublane: int, target_bytes: int):
    """Pick (tb, tc) for the flattened (B, cols) layout. `cols` is a multiple of 128.
    `stream_itemsize` = bytes per element streamed per block (x tile + out tile)."""
    total_bytes = batch * cols * stream_itemsize

    # ---- Column (lane) tile: multiple of 128, <=4096 lanes; keep the tile count even
    # when there is more than one tile so the two v7x TensorCores get balanced work.
    if cols <= 4096:
        tc = cols
    else:
        n_col = _cdiv(cols, 4096)
        if n_col > 1 and n_col % 2 == 1:
            n_col += 1
        tc = _round_up(_cdiv(cols, n_col), 128)

    # ---- Row (sublane) tile targeting `target_bytes` per block.
    rows_target = max(1, target_bytes // (tc * stream_itemsize))
    if batch <= rows_target:
        tb = batch                                   # full dim -> always a legal block size
    else:
        tb = max(sublane, (min(rows_target, batch) // sublane) * sublane)
        # Prefer a tb that divides batch evenly (no masked partial last block),
        # as long as it doesn't shrink the tile below half the target.
        if batch % tb != 0:
            for cand in range(tb, sublane - 1, -sublane):
                if batch % cand == 0:
                    if cand * 2 >= tb:
                        tb = cand
                    break

    # ---- Megacore backstop: for big problems make sure there are >=2 grid steps
    # so both v7x TensorCores run (each TC has its own HBM path).
    n_col = _cdiv(cols, tc)
    n_row = _cdiv(batch, tb)
    if total_bytes > (4 << 20) and n_col * n_row < 2:
        if cols >= 256:
            tc = _round_up(_cdiv(cols, 2), 128)
        elif batch >= 2 * sublane:
            tb = _round_up(_cdiv(batch, 2), sublane)

    return tb, tc


def positional_encoding_forward(x: jnp.ndarray, pe_full: jnp.ndarray) -> jnp.ndarray:
    """x: (B, S, D); pe_full: (max_len, D) float32. Returns x + pe[:S] (broadcast over
    batch) with torch's dtype promotion semantics."""
    B, S, D = x.shape
    assert pe_full.shape[0] >= S, "sequence length exceeds max_len of the pe table"

    out_dtype = jnp.promote_types(x.dtype, pe_full.dtype)
    pe = pe_full[:S, :]                              # (S, D) float32 slice (plain JAX)

    x_item = jnp.dtype(x.dtype).itemsize
    pe_item = jnp.dtype(pe.dtype).itemsize
    out_item = jnp.dtype(out_dtype).itemsize
    # Sublane packing of the narrowest streamed dtype: 8 (f32), 16 (bf16), 32 (i8/fp8).
    sublane = max(8, 32 // min(x_item, out_item))

    cols = S * D
    x2 = x.reshape(B, cols)
    pe2 = pe.reshape(1, cols)

    # Lane-dense: pad the flattened axis to a multiple of 128 (<=127 zeros per row) so
    # every store in the kernel is a full-width vst; slice the padding off afterwards.
    cols_pad = _round_up(cols, 128)
    if cols_pad != cols:
        x2 = jnp.pad(x2, ((0, 0), (0, cols_pad - cols)))
        pe2 = jnp.pad(pe2, ((0, 0), (0, cols_pad - cols)))

    target = _target_block_bytes()
    tb, tc = _pick_flat_tiles(B, cols_pad, x_item + out_item, sublane, target)
    # Column tiles outer, batch tiles inner: pe's block index only depends on the outer
    # axis, so the pe tile stays VMEM-resident across consecutive (inner) steps.
    grid = (_cdiv(cols_pad, tc), _cdiv(B, tb))

    # Scoped-VMEM need: double-buffered x & out tiles + double-buffered pe tile + headroom.
    vmem_need = 2 * tb * tc * (x_item + out_item) + 2 * tc * pe_item + (4 << 20)

    # Advisory cost hint: this op is purely HBM-bandwidth bound.
    cost = pl.CostEstimate(
        flops=B * cols,
        transcendentals=0,
        bytes_accessed=B * cols * (x_item + out_item) + cols * pe_item,
    )

    out2 = pl.pallas_call(
        _pe_add_kernel,
        out_shape=jax.ShapeDtypeStruct((B, cols_pad), out_dtype),
        grid=grid,
        in_specs=[
            pl.BlockSpec((tb, tc), lambda c, r: (r, c)),   # x tile
            pl.BlockSpec((1, tc), lambda c, r: (0, c)),    # pe row (resident across batch)
        ],
        out_specs=pl.BlockSpec((tb, tc), lambda c, r: (r, c)),
        compiler_params=pltpu.CompilerParams(
            dimension_semantics=("parallel", "parallel"),
            vmem_limit_bytes=int(vmem_need),
        ),
        cost_estimate=cost,
    )(x2, pe2)

    if cols_pad != cols:
        out2 = out2[:, :cols]
    return out2.reshape(B, S, D)


# TODO(synk): for end-to-end speed this add should be fused into the adjacent
# embedding / first-projection kernel; as a standalone op it is HBM-roofline bound.


if __name__ == "__main__":
    key = jax.random.PRNGKey(0)
    max_len = 256

    # Case 1: 128-aligned flattened width (direct lane-dense path).
    B, S, D = 2, 8, 32
    x = jax.random.normal(key, (B, S, D), dtype=jnp.float32)
    pe_full = make_positional_encoding(D, max_len)
    out = jax.block_until_ready(positional_encoding_forward(x, pe_full))
    ref = x + pe_full[None, :S, :]
    assert out.shape == (B, S, D) and out.dtype == ref.dtype
    assert jnp.allclose(out, ref, atol=1e-6, rtol=1e-6), "mismatch vs reference (case 1)"

    # Case 2: S*D not a multiple of 128 -> exercises the pad-to-128 lane-dense path.
    B2, S2, D2 = 2, 7, 20
    x2 = jax.random.normal(jax.random.PRNGKey(1), (B2, S2, D2), dtype=jnp.float32)
    pe_full2 = make_positional_encoding(D2, max_len)
    out2 = jax.block_until_ready(positional_encoding_forward(x2, pe_full2))
    ref2 = x2 + pe_full2[None, :S2, :]
    assert out2.shape == (B2, S2, D2)
    assert jnp.allclose(out2, ref2, atol=1e-6, rtol=1e-6), "mismatch vs reference (case 2)"

    print("KERNEL_OK")
</pallas_src>

<mosaic_0001>
module attributes {stable_mosaic.version = 11 : i64} {
  func.func @_pe_add_kernel(%arg0: i32, %arg1: i32, %arg2: memref<2x256xf32, #tpu.memory_space<vmem>>, %arg3: memref<1x256xf32, #tpu.memory_space<vmem>>, %arg4: memref<2x256xf32, #tpu.memory_space<vmem>>) attributes {dimension_semantics = [#tpu.dimension_semantics<parallel>, #tpu.dimension_semantics<parallel>], iteration_bounds = array<i64: 1, 1>, scalar_prefetch = 0 : i64, scratch_operands = 0 : i64, tpu.core_type = #tpu.core_type<tc>, window_params = [{transform_indices = @transform_0, window_bounds = array<i64: 2, 256>}, {transform_indices = @transform_1, window_bounds = array<i64: 1, 256>}, {transform_indices = @transform_2, window_bounds = array<i64: 2, 256>}]} {
    %c0 = arith.constant 0 : index
    %c0_0 = arith.constant 0 : index
    %0 = vector.load %arg2[%c0, %c0_0] : memref<2x256xf32, #tpu.memory_space<vmem>>, vector<2x256xf32>
    %c0_1 = arith.constant 0 : index
    %c0_2 = arith.constant 0 : index
    %1 = vector.load %arg3[%c0_1, %c0_2] : memref<1x256xf32, #tpu.memory_space<vmem>>, vector<1x256xf32>
    %2 = vector.broadcast %1 : vector<1x256xf32> to vector<2x256xf32>
    %3 = arith.addf %0, %2 : vector<2x256xf32>
    %c0_3 = arith.constant 0 : index
    %c0_4 = arith.constant 0 : index
    %4 = vector.load %arg4[%c0_3, %c0_4] : memref<2x256xf32, #tpu.memory_space<vmem>>, vector<2x256xf32>
    tpu.vector_store %arg4[%c0_3, %c0_4], %3 {strides = array<i32>} : memref<2x256xf32, #tpu.memory_space<vmem>>, vector<2x256xf32>,
    return
  }
  func.func @transform_0(%arg0: i32, %arg1: i32) -> (i32, i32) {
    %c0_i32 = arith.constant 0 : i32
    return %arg1, %arg0 : i32, i32
  }
  func.func @transform_1(%arg0: i32, %arg1: i32) -> (i32, i32) {
    %c0_i32 = arith.constant 0 : i32
    %c0_i32_0 = arith.constant 0 : i32
    return %c0_i32, %arg0 : i32, i32
  }
  func.func @transform_2(%arg0: i32, %arg1: i32) -> (i32, i32) {
    %c0_i32 = arith.constant 0 : i32
    return %arg1, %arg0 : i32, i32
  }
}

</mosaic_0001>

<llo_original>
// kernel: tpu_custom_call.1
$region0: #{tpu_custom_call.1}
  #allocation0 [shape = 'u32[]', space=smem, size = 0x4, offset = 0x4, fixed_abs, tag = 'smem constant byte address 0x4 - core index']
  #allocation1 [shape = 'u32[144,128]{1,0:T(1,128)}', space=vmem, size = 0x12000, scoped, tag = 'internal scratch']
  %s0 = inlined_call_operand.hbm [shape: f32[2,256], index: 0, kind: input, shape index: {}]
  %s1 = inlined_call_operand.vmem [shape: f32[1,256], index: 1, kind: input, shape index: {}]
  %s2 = inlined_call_operand.hbm [shape: f32[2,256], index: 2, kind: output, shape index: {}]
  %s3 = sld [smem:[#allocation0]]
  $region22: #{tpu_custom_call.1} parent=0
    _
  %s5 = ssub.s32 1, %s3
  %s6 = scalar_select 0, %s5, %s3
  $region1: #{tpu_custom_call.1} parent=0
    #allocation2 [shape = 'u8[2048]{0}', space=vmem, size = 0x800, scoped, tag = 'input window, operand 0, single buffered']
    #allocation3 [shape = 's32[1]{0}', space=sflag, size = 0x4, scoped, tag = 'scoped memory for tpu_custom_call.1']
    #allocation4 [shape = 's32[1]{0}', space=sflag, size = 0x4, scoped, tag = 'scoped memory for tpu_custom_call.1']
    #allocation5 [shape = 'u8[2048]{0}', space=vmem, size = 0x800, scoped, tag = 'output window, operand 0, single buffered']
    %7 = vsyncpa [#allocation3], 0
    %8 = vsyncpa [#allocation4], 0
    // Predicated region
    $region2: #{tpu_custom_call.1} parent=1 // pred_check
      _
    $region3: #{tpu_custom_call.1} parent=1 // pred_check_branch
      %10 = sbr.rel (0) target = $region5
    $region4: #{tpu_custom_call.1} parent=1 // pred_region
      %s12 = ssub.s32 64, 64
      %13 = vsyncadd [#allocation3], %s12
      %s15 = sshll.u32 [#allocation2], 4
      %s16 = int_to_ptr.vmem [resolvable:$true] %s15
      %18 = dma.hbm_to_vmem [thread:$0]  %s0, 64, %s16, [#allocation3]
    $region5: #{tpu_custom_call.1} parent=1 // pred_fallthru
      _
    // Predicated region
    $region6: #{tpu_custom_call.1} parent=1 // pred_check
      _
    $region7: #{tpu_custom_call.1} parent=1 // pred_check_branch
      %20 = sbr.rel (0) target = $region9
    $region8: #{tpu_custom_call.1} parent=1 // pred_region
      _
    $region9: #{tpu_custom_call.1} parent=1 // pred_fallthru
      _
    // Predicated region
    $region10: #{tpu_custom_call.1} parent=1 // pred_check
      _
    $region11: #{tpu_custom_call.1} parent=1 // pred_check_branch
      %22 = sbr.rel (0) target = $region13
    $region12: #{tpu_custom_call.1} parent=1 // pred_region
      %23 = dma.done [#allocation3], 64
    $region13: #{tpu_custom_call.1} parent=1 // pred_fallthru
      _
    %v24 = vld [vmem:[#allocation2] sm:$0xf]
    %v25 = vld [vmem:[%s1] sm:$0x3]
    %v27 = vlaneseq
    %v28 = vshrl.u32 %v27, 7
    %v29 = vsub.s32 0, %v28
    %v30 = vrot.slane %v25, %v29
    %v31 = vlaneseq
    %v32 = vshrl.u32 %v31, 7
    %v33 = vsub.s32 1, %v32
    %v34 = vrot.slane %v25, %v33
    %v35 = vcombine.low %v30, %v34
    %v37 = vunpack.c.l.s4 1983009808
    %v38 = vunpack.c.0.s8 %v37
    %v39 = vlaneseq
    %v40 = vshrl.u32 %v39, 7
    %v41 = vsub.s32 %v38, %v40
    %v42 = vrot.slane %v35, %v41
    %v44 = vadd.f32 %v24, %v42
    %45 = vst [vmem:[#allocation5] sm:$0xf] %v44
    // Predicated region
    $region14: #{tpu_custom_call.1} parent=1 // pred_check
      _
    $region15: #{tpu_custom_call.1} parent=1 // pred_check_branch
      %47 = sbr.rel (0) target = $region17
    $region16: #{tpu_custom_call.1} parent=1 // pred_region
      %s49 = ssub.s32 64, 64
      %50 = vsyncadd [#allocation4], %s49
      %s52 = sshll.u32 [#allocation5], 4
      %s53 = int_to_ptr.vmem [resolvable:$true] %s52
      %55 = dma.vmem_to_hbm [thread:$0]  %s53, 64, %s2, [#allocation4]
    $region17: #{tpu_custom_call.1} parent=1 // pred_fallthru
      _
    // Predicated region
    $region18: #{tpu_custom_call.1} parent=1 // pred_check
      _
    $region19: #{tpu_custom_call.1} parent=1 // pred_check_branch
      %57 = sbr.rel (0) target = $region21
    $region20: #{tpu_custom_call.1} parent=1 // pred_region
      %58 = dma.done [#allocation4], 64
    $region21: #{tpu_custom_call.1} parent=1 // pred_fallthru
      _
    %59 = vsyncpa [#allocation3], 1
    %60 = vsyncpa [#allocation4], 1

</llo_original>
